<compile_context>
chip_gen: v5e
topology: v5e:2x2
jax: 0.10.0
libtpu: 0.0.40
codegen_flags: <defaults>
</compile_context>

<pallas_src>
import functools
import math

import jax
import jax.numpy as jnp
from jax.experimental import pallas as pl
from jax.experimental.pallas import tpu as pltpu

_TWO_PI_E = 2.0 * math.pi * math.e

# Target ~512 KiB per input block -> 4 inputs x 2 pipeline buffers = 4 MiB
# live VMEM, well under the scoped limit on every TPU generation.
_TARGET_BLOCK_ELEMS = 128 * 1024
# Layers below this element count go through the fused pure-jnp path.
_PALLAS_MIN_ELEMS = 1 << 16


def _stable_softplus(x):
    # log(1 + exp(x)) without overflow for x >> 0 or log(0) for x << 0.
    return jnp.maximum(x, 0.0) + jnp.log1p(jnp.exp(-jnp.abs(x)))


def _bkl_layer_kernel(mu0_ref, rho0_ref, mu1_ref, rho1_ref, out_ref, *,
                      out_features, tile_rows, in_features):
    """One grid step: reduce a (tile_rows, in_features) block of
    (KL + entropy) and accumulate into the resident (1, 1) output block."""
    i = pl.program_id(0)

    @pl.when(i == 0)
    def _init():
        out_ref[...] = jnp.zeros_like(out_ref)

    mu0 = mu0_ref[...].astype(jnp.float32)
    rho0 = rho0_ref[...].astype(jnp.float32)
    mu1 = mu1_ref[...].astype(jnp.float32)
    rho1 = rho1_ref[...].astype(jnp.float32)

    sigma0 = _stable_softplus(rho0)          # log(1 + exp(rho0))
    sigma1 = _stable_softplus(rho1)          # log(1 + exp(rho1))

    # log(sigma1 / sigma0) -> log(sigma1) - log(sigma0); division -> EUP recip.
    log_ratio = jnp.log(sigma1) - jnp.log(sigma0)
    inv_2s1sq = pl.reciprocal(2.0 * sigma1 * sigma1, approx=True)
    diff = mu0 - mu1
    kl = log_ratio + (sigma0 * sigma0 + diff * diff) * inv_2s1sq - 0.5
    entropy = _TWO_PI_E * sigma0             # matches torch gaussian_entropy()

    val = kl + entropy
    if out_features % tile_rows != 0:
        # Only the final row tile is partial; Pallas pads the out-of-bounds
        # rows with unspecified data, so mask them out exactly (jnp.where is
        # a select, so garbage/NaN in masked rows never propagates).
        row = jax.lax.broadcasted_iota(jnp.int32, (tile_rows, in_features), 0)
        val = jnp.where(i * tile_rows + row < out_features, val, 0.0)

    out_ref[...] += jnp.sum(val)


def _bkl_layer_pallas(mu0, rho0, mu1, rho1, *,
                      target_block_elems=_TARGET_BLOCK_ELEMS):
    """Fused KL + entropy sum for one BayesLinear layer, reading the original
    (out_features, in_features) tensors with no padding/copy. Returns a
    float32 scalar."""
    out_f, in_f = mu0.shape

    # Row tile: full out_features when it fits the VMEM budget, otherwise the
    # largest multiple of 8 rows within the per-block element target.  The
    # last dim is always the full in_features (legal regardless of 128
    # alignment).  Extremely wide layers (in_features >> 1e6) would need
    # column tiling as well; BayesLinear layers never get near that.
    max_rows = max(1, target_block_elems // max(in_f, 1))
    if out_f <= max(max_rows, 8):
        tile_rows = out_f
    else:
        tile_rows = max(8, (max_rows // 8) * 8)
    grid = (pl.cdiv(out_f, tile_rows),)

    in_spec = pl.BlockSpec((tile_rows, in_f), lambda i: (i, 0))
    kernel = functools.partial(
        _bkl_layer_kernel, out_features=out_f, tile_rows=tile_rows,
        in_features=in_f)

    out = pl.pallas_call(
        kernel,
        out_shape=jax.ShapeDtypeStruct((1, 1), jnp.float32),
        grid=grid,
        in_specs=[in_spec, in_spec, in_spec, in_spec],
        out_specs=pl.BlockSpec((1, 1), lambda i: (0, 0)),
        compiler_params=pltpu.CompilerParams(
            # Reduction into a resident accumulator block -> "arbitrary".
            dimension_semantics=("arbitrary",),
            vmem_limit_bytes=32 * 1024 * 1024,
        ),
    )(mu0, rho0, mu1, rho1)
    return out.reshape(())


def _reference_layer(mu0, rho0, mu1, rho1):
    """Pure-jnp per-layer KL + entropy sum (faithful to the torch formulas)."""
    s0 = jnp.log(1.0 + jnp.exp(rho0))
    s1 = jnp.log(1.0 + jnp.exp(rho1))
    kl = jnp.log(s1 / s0) + (s0 ** 2 + (mu0 - mu1) ** 2) / (2.0 * s1 ** 2) - 0.5
    ent = _TWO_PI_E * s0
    return jnp.sum(kl) + jnp.sum(ent)


def _reference_bkl_loss(model_layers):
    total = jnp.zeros((), jnp.float32)
    for layer in model_layers:
        mu0, rho0, mu1, rho1 = (a.astype(jnp.float32) for a in layer)
        total = total + _reference_layer(mu0, rho0, mu1, rho1)
    return total.reshape(1)


def bkl_loss(model_layers, *, force_pallas=False,
             target_block_elems=_TARGET_BLOCK_ELEMS):
    """Equivalent of BKLLoss()(model) for a list of
    (weights_mu, weights_rho, prior_mu, prior_rho) layer tuples.
    Returns shape (1,) float32, like the torch kl_sum."""
    total = jnp.zeros((), jnp.float32)
    for layer in model_layers:
        mu0, rho0, mu1, rho1 = (a.astype(jnp.float32) for a in layer)
        if force_pallas or int(mu0.size) >= _PALLAS_MIN_ELEMS:
            total = total + _bkl_layer_pallas(
                mu0, rho0, mu1, rho1, target_block_elems=target_block_elems)
        else:
            # Tiny layer: Pallas launch overhead dominates; let XLA fuse it.
            total = total + _reference_layer(mu0, rho0, mu1, rho1)
    return total.reshape(1)


def make_bayes_linear(key, in_features, out_features):
    """Mimics BayesLinear.__init__: weights_mu/rho are zeros Parameters,
    prior_mu/rho ~ Normal(0, 1) (deterministic via the provided key)."""
    k1, k2 = jax.random.split(key)
    weights_mu = jnp.zeros((out_features, in_features), jnp.float32)
    weights_rho = jnp.zeros((out_features, in_features), jnp.float32)
    prior_mu = jax.random.normal(k1, (out_features, in_features), jnp.float32)
    prior_rho = jax.random.normal(k2, (out_features, in_features), jnp.float32)
    return (weights_mu, weights_rho, prior_mu, prior_rho)


if __name__ == "__main__":
    key = jax.random.PRNGKey(0)
    k1, k2, k3, k4 = jax.random.split(key, 4)

    # Small "model": BayesLinear layers 32->16, 16->8, one 128x128 layer and
    # one lane/sublane-unaligned 100->37 layer (exercises full-array blocks,
    # multi-step tiling and partial-tile masking).
    model_layers = [
        make_bayes_linear(k1, in_features=32, out_features=16),
        make_bayes_linear(k2, in_features=16, out_features=8),
        make_bayes_linear(k3, in_features=128, out_features=128),
        make_bayes_linear(k4, in_features=100, out_features=37),
    ]

    ref = jax.block_until_ready(_reference_bkl_loss(model_layers))

    # Every layer through the Pallas kernel at the default tile target.
    loss = jax.block_until_ready(bkl_loss(model_layers, force_pallas=True))
    # A tiny tile target forces multi-step reduction grids (128x128 -> 8
    # steps) and a masked partial final tile on the 37x100 layer.
    loss_tiled = jax.block_until_ready(
        bkl_loss(model_layers, force_pallas=True, target_block_elems=16 * 128))
    # Size-based dispatch path (these layers are tiny -> fused jnp path).
    loss_auto = jax.block_until_ready(bkl_loss(model_layers))

    for got in (loss, loss_tiled, loss_auto):
        assert got.shape == (1,)
        # Tolerance accounts for the EUP approximate reciprocal + summation
        # order; real formula/masking bugs produce far larger errors.
        assert jnp.allclose(got, ref, rtol=5e-3, atol=1.0), (got, ref)

    print("KERNEL_OK")
</pallas_src>

<mosaic_0001>
module attributes {stable_mosaic.version = 11 : i64} {
  func.func @_bkl_layer_kernel(%arg0: i32, %arg1: memref<16x32xf32, #tpu.memory_space<vmem>>, %arg2: memref<16x32xf32, #tpu.memory_space<vmem>>, %arg3: memref<16x32xf32, #tpu.memory_space<vmem>>, %arg4: memref<16x32xf32, #tpu.memory_space<vmem>>, %arg5: memref<1x1xf32, #tpu.memory_space<vmem>>) attributes {dimension_semantics = [#tpu.dimension_semantics<arbitrary>], iteration_bounds = array<i64: 1>, scalar_prefetch = 0 : i64, scratch_operands = 0 : i64, tpu.core_type = #tpu.core_type<tc>, window_params = [{transform_indices = @transform_0, window_bounds = array<i64: 16, 32>}, {transform_indices = @transform_1, window_bounds = array<i64: 16, 32>}, {transform_indices = @transform_2, window_bounds = array<i64: 16, 32>}, {transform_indices = @transform_3, window_bounds = array<i64: 16, 32>}, {pipeline_mode = #tpu.pipeline_mode<synchronous>, transform_indices = @transform_4, window_bounds = array<i64: 1, 1>}]} {
    %c0_i32 = arith.constant 0 : i32
    %0 = arith.cmpi eq, %arg0, %c0_i32 : i32
    %1 = arith.extui %0 : i1 to i32
    %c0_i32_0 = arith.constant 0 : i32
    %2 = arith.cmpi ne, %1, %c0_i32_0 : i32
    scf.if %2 {
      %cst_19 = arith.constant 0.000000e+00 : f32
      %49 = vector.broadcast %cst_19 : f32 to vector<1x1xf32>
      %c0_20 = arith.constant 0 : index
      %c0_21 = arith.constant 0 : index
      %50 = vector.load %arg5[%c0_20, %c0_21] : memref<1x1xf32, #tpu.memory_space<vmem>>, vector<1x1xf32>
      tpu.vector_store %arg5[%c0_20, %c0_21], %49 {strides = array<i32>} : memref<1x1xf32, #tpu.memory_space<vmem>>, vector<1x1xf32>,
    } else {
    }
    %c0 = arith.constant 0 : index
    %c0_1 = arith.constant 0 : index
    %3 = vector.load %arg1[%c0, %c0_1] : memref<16x32xf32, #tpu.memory_space<vmem>>, vector<16x32xf32>
    %c0_2 = arith.constant 0 : index
    %c0_3 = arith.constant 0 : index
    %4 = vector.load %arg2[%c0_2, %c0_3] : memref<16x32xf32, #tpu.memory_space<vmem>>, vector<16x32xf32>
    %c0_4 = arith.constant 0 : index
    %c0_5 = arith.constant 0 : index
    %5 = vector.load %arg3[%c0_4, %c0_5] : memref<16x32xf32, #tpu.memory_space<vmem>>, vector<16x32xf32>
    %c0_6 = arith.constant 0 : index
    %c0_7 = arith.constant 0 : index
    %6 = vector.load %arg4[%c0_6, %c0_7] : memref<16x32xf32, #tpu.memory_space<vmem>>, vector<16x32xf32>
    %cst = arith.constant 0.000000e+00 : f32
    %7 = vector.broadcast %cst : f32 to vector<16x32xf32>
    %8 = arith.maximumf %4, %7 : vector<16x32xf32>
    %9 = math.absf %4 : vector<16x32xf32>
    %cst_8 = arith.constant 0.000000e+00 : f32
    %10 = vector.broadcast %cst_8 : f32 to vector<16x32xf32>
    %11 = arith.subf %10, %9 : vector<16x32xf32>
    %12 = math.exp %11 : vector<16x32xf32>
    %13 = math.log1p %12 : vector<16x32xf32>
    %14 = arith.addf %8, %13 : vector<16x32xf32>
    %cst_9 = arith.constant 0.000000e+00 : f32
    %15 = vector.broadcast %cst_9 : f32 to vector<16x32xf32>
    %16 = arith.maximumf %6, %15 : vector<16x32xf32>
    %17 = math.absf %6 : vector<16x32xf32>
    %cst_10 = arith.constant 0.000000e+00 : f32
    %18 = vector.broadcast %cst_10 : f32 to vector<16x32xf32>
    %19 = arith.subf %18, %17 : vector<16x32xf32>
    %20 = math.exp %19 : vector<16x32xf32>
    %21 = math.log1p %20 : vector<16x32xf32>
    %22 = arith.addf %16, %21 : vector<16x32xf32>
    %23 = math.log %22 : vector<16x32xf32>
    %24 = math.log %14 : vector<16x32xf32>
    %25 = arith.subf %23, %24 : vector<16x32xf32>
    %cst_11 = arith.constant 2.000000e+00 : f32
    %26 = vector.broadcast %cst_11 : f32 to vector<16x32xf32>
    %27 = arith.mulf %26, %22 : vector<16x32xf32>
    %28 = arith.mulf %27, %22 : vector<16x32xf32>
    %29 = tpu.reciprocal %28 {approx = true} : vector<16x32xf32> -> vector<16x32xf32>
    %30 = arith.subf %3, %5 : vector<16x32xf32>
    %31 = arith.mulf %14, %14 : vector<16x32xf32>
    %32 = arith.mulf %30, %30 : vector<16x32xf32>
    %33 = arith.addf %31, %32 : vector<16x32xf32>
    %34 = arith.mulf %33, %29 : vector<16x32xf32>
    %35 = arith.addf %25, %34 : vector<16x32xf32>
    %cst_12 = arith.constant 5.000000e-01 : f32
    %36 = vector.broadcast %cst_12 : f32 to vector<16x32xf32>
    %37 = arith.subf %35, %36 : vector<16x32xf32>
    %cst_13 = arith.constant 17.0794678 : f32
    %38 = vector.broadcast %cst_13 : f32 to vector<16x32xf32>
    %39 = arith.mulf %38, %14 : vector<16x32xf32>
    %40 = arith.addf %37, %39 : vector<16x32xf32>
    %c0_14 = arith.constant 0 : index
    %c0_15 = arith.constant 0 : index
    %41 = vector.load %arg5[%c0_14, %c0_15] : memref<1x1xf32, #tpu.memory_space<vmem>>, vector<1x1xf32>
    %42 = vector.shape_cast %40 : vector<16x32xf32> to vector<1x16x32xf32>
    %cst_16 = arith.constant dense<0.000000e+00> : vector<1xf32>
    %43 = vector.multi_reduction <add>, %42, %cst_16 [1, 2] : vector<1x16x32xf32> to vector<1xf32>
    %44 = vector.shape_cast %43 : vector<1xf32> to vector<1x1x1xf32>
    %45 = vector.extract %44[0, 0, 0] : f32 from vector<1x1x1xf32>
    %46 = vector.broadcast %45 : f32 to vector<1x1xf32>
    %47 = arith.addf %41, %46 : vector<1x1xf32>
    %c0_17 = arith.constant 0 : index
    %c0_18 = arith.constant 0 : index
    %48 = vector.load %arg5[%c0_17, %c0_18] : memref<1x1xf32, #tpu.memory_space<vmem>>, vector<1x1xf32>
    tpu.vector_store %arg5[%c0_17, %c0_18], %47 {strides = array<i32>} : memref<1x1xf32, #tpu.memory_space<vmem>>, vector<1x1xf32>,
    return
  }
  func.func @transform_0(%arg0: i32) -> (i32, i32) {
    %c0_i32 = arith.constant 0 : i32
    %c0_i32_0 = arith.constant 0 : i32
    return %arg0, %c0_i32 : i32, i32
  }
  func.func @transform_1(%arg0: i32) -> (i32, i32) {
    %c0_i32 = arith.constant 0 : i32
    %c0_i32_0 = arith.constant 0 : i32
    return %arg0, %c0_i32 : i32, i32
  }
  func.func @transform_2(%arg0: i32) -> (i32, i32) {
    %c0_i32 = arith.constant 0 : i32
    %c0_i32_0 = arith.constant 0 : i32
    return %arg0, %c0_i32 : i32, i32
  }
  func.func @transform_3(%arg0: i32) -> (i32, i32) {
    %c0_i32 = arith.constant 0 : i32
    %c0_i32_0 = arith.constant 0 : i32
    return %arg0, %c0_i32 : i32, i32
  }
  func.func @transform_4(%arg0: i32) -> (i32, i32) {
    %c0_i32 = arith.constant 0 : i32
    %c0_i32_0 = arith.constant 0 : i32
    %c0_i32_1 = arith.constant 0 : i32
    return %c0_i32, %c0_i32_0 : i32, i32
  }
}

</mosaic_0001>

<llo_original>
// kernel: tpu_custom_call.1
$region0: #{tpu_custom_call.1}
  #allocation0 [shape = 'u32[]', space=smem, size = 0x4, offset = 0x4, fixed_abs, tag = 'smem constant byte address 0x4 - core index']
  #allocation1 [shape = 'u32[72,128]{1,0:T(1,128)}', space=vmem, size = 0x9000, scoped, tag = 'internal scratch']
  %s0 = inlined_call_operand.hbm [shape: f32[16,32], index: 0, kind: input, shape index: {}]
  %s1 = inlined_call_operand.hbm [shape: f32[16,32], index: 1, kind: input, shape index: {}]
  %s2 = inlined_call_operand.hbm [shape: f32[16,32], index: 2, kind: input, shape index: {}]
  %s3 = inlined_call_operand.hbm [shape: f32[16,32], index: 3, kind: input, shape index: {}]
  %s4 = inlined_call_operand.hbm [shape: f32[1,1], index: 4, kind: output, shape index: {}]
  %s5 = sld [smem:[#allocation0]]
  $region46: #{tpu_custom_call.1} parent=0
    _
  %s7 = ssub.s32 1, %s5
  %s8 = scalar_select 0, %s7, %s5
  $region1: #{tpu_custom_call.1} parent=0
    #allocation2 [shape = 'u8[8192]{0}', space=vmem, size = 0x2000, scoped, tag = 'input window, operand 0, single buffered']
    #allocation3 [shape = 's32[1]{0}', space=sflag, size = 0x4, scoped, tag = 'scoped memory for tpu_custom_call.1']
    #allocation4 [shape = 's32[1]{0}', space=sflag, size = 0x4, scoped, tag = 'scoped memory for tpu_custom_call.1']
    #allocation5 [shape = 'u8[8192]{0}', space=vmem, size = 0x2000, scoped, tag = 'input window, operand 1, single buffered']
    #allocation6 [shape = 's32[1]{0}', space=sflag, size = 0x4, scoped, tag = 'scoped memory for tpu_custom_call.1']
    #allocation7 [shape = 'u8[8192]{0}', space=vmem, size = 0x2000, scoped, tag = 'input window, operand 2, single buffered']
    #allocation8 [shape = 'u8[8192]{0}', space=vmem, size = 0x2000, scoped, tag = 'input window, operand 3, single buffered']
    #allocation9 [shape = 's32[1]{0}', space=sflag, size = 0x4, scoped, tag = 'scoped memory for tpu_custom_call.1']
    #allocation10 [shape = 'u8[512]{0}', space=vmem, size = 0x400, scoped, tag = 'output window, operand 0, single buffered']
    %9 = vsyncpa [#allocation3], 0
    %10 = vsyncpa [#allocation6], 0
    %11 = vsyncpa [#allocation9], 0
    %12 = vsyncpa [#allocation4], 0
    // Predicated region
    $region2: #{tpu_custom_call.1} parent=1 // pred_check
      _
    $region3: #{tpu_custom_call.1} parent=1 // pred_check_branch
      %14 = sbr.rel (0) target = $region5
    $region4: #{tpu_custom_call.1} parent=1 // pred_region
      %16 = vsyncadd [#allocation3], 0
      %s17 = sshll.u32 %s0, 4
      %s18 = int_to_ptr.hbm [resolvable:$true] %s17
      %s19 = sshll.u32 [#allocation2], 4
      %s20 = int_to_ptr.vmem [resolvable:$true] %s19
      %25 = dma.hbm_to_vmem [thread:$0]  %s18, 256, %s20, [#allocation3], 128, 128, 8
    $region5: #{tpu_custom_call.1} parent=1 // pred_fallthru
      _
    // Predicated region
    $region6: #{tpu_custom_call.1} parent=1 // pred_check
      _
    $region7: #{tpu_custom_call.1} parent=1 // pred_check_branch
      %27 = sbr.rel (0) target = $region9
    $region8: #{tpu_custom_call.1} parent=1 // pred_region
      %29 = vsyncadd [#allocation6], 0
      %s30 = sshll.u32 %s1, 4
      %s31 = int_to_ptr.hbm [resolvable:$true] %s30
      %s32 = sshll.u32 [#allocation5], 4
      %s33 = int_to_ptr.vmem [resolvable:$true] %s32
      %38 = dma.hbm_to_vmem [thread:$0]  %s31, 256, %s33, [#allocation6], 128, 128, 8
    $region9: #{tpu_custom_call.1} parent=1 // pred_fallthru
      _
    // Predicated region
    $region10: #{tpu_custom_call.1} parent=1 // pred_check
      _
    $region11: #{tpu_custom_call.1} parent=1 // pred_check_branch
      %40 = sbr.rel (0) target = $region13
    $region12: #{tpu_custom_call.1} parent=1 // pred_region
      %42 = vsyncadd [#allocation6], 0
      %s43 = sshll.u32 %s2, 4
      %s44 = int_to_ptr.hbm [resolvable:$true] %s43
      %s45 = sshll.u32 [#allocation7], 4
      %s46 = int_to_ptr.vmem [resolvable:$true] %s45
      %51 = dma.hbm_to_vmem [thread:$0]  %s44, 256, %s46, [#allocation6], 128, 128, 8
    $region13: #{tpu_custom_call.1} parent=1 // pred_fallthru
      _
    // Predicated region
    $region14: #{tpu_custom_call.1} parent=1 // pred_check
      _
    $region15: #{tpu_custom_call.1} parent=1 // pred_check_branch
      %53 = sbr.rel (0) target = $region17
    $region16: #{tpu_custom_call.1} parent=1 // pred_region
      %55 = vsyncadd [#allocation9], 0
      %s56 = sshll.u32 %s3, 4
      %s57 = int_to_ptr.hbm [resolvable:$true] %s56
      %s58 = sshll.u32 [#allocation8], 4
      %s59 = int_to_ptr.vmem [resolvable:$true] %s58
      %64 = dma.hbm_to_vmem [thread:$0]  %s57, 256, %s59, [#allocation9], 128, 128, 8
    $region17: #{tpu_custom_call.1} parent=1 // pred_fallthru
      _
    // Predicated region
    $region18: #{tpu_custom_call.1} parent=1 // pred_check
      _
    $region19: #{tpu_custom_call.1} parent=1 // pred_check_branch
      %66 = sbr.rel (0) target = $region21
    $region20: #{tpu_custom_call.1} parent=1 // pred_region
      %68 = dma.done [#allocation3], 256
    $region21: #{tpu_custom_call.1} parent=1 // pred_fallthru
      _
    // Predicated region
    $region22: #{tpu_custom_call.1} parent=1 // pred_check
      _
    $region23: #{tpu_custom_call.1} parent=1 // pred_check_branch
      %70 = sbr.rel (0) target = $region25
    $region24: #{tpu_custom_call.1} parent=1 // pred_region
      %72 = dma.done [#allocation6], 256
    $region25: #{tpu_custom_call.1} parent=1 // pred_fallthru
      _
    // Predicated region
    $region26: #{tpu_custom_call.1} parent=1 // pred_check
      _
    $region27: #{tpu_custom_call.1} parent=1 // pred_check_branch
      %74 = sbr.rel (0) target = $region29
    $region28: #{tpu_custom_call.1} parent=1 // pred_region
      %76 = dma.done [#allocation6], 256
    $region29: #{tpu_custom_call.1} parent=1 // pred_fallthru
      _
    // Predicated region
    $region30: #{tpu_custom_call.1} parent=1 // pred_check
      _
    $region31: #{tpu_custom_call.1} parent=1 // pred_check_branch
      %78 = sbr.rel (0) target = $region33
    $region32: #{tpu_custom_call.1} parent=1 // pred_region
      %80 = dma.done [#allocation9], 256
    $region33: #{tpu_custom_call.1} parent=1 // pred_fallthru
      _
    %p81 = scmp.eq.s32.totalorder 0, 0
    // Predicated region
    $region34: #{tpu_custom_call.1} parent=1 // pred_check
      %p82 = pneg %p81
    $region35: #{tpu_custom_call.1} parent=1 // pred_check_branch
      %84 = sbr.rel (%p82) target = $region37
    $region36: #{tpu_custom_call.1} parent=1 // pred_region
      %vm85 = vcmask 0
      %86 = vst.msk [vmem:[#allocation10] sm:$0x1] %vm85, 0.0
    $region37: #{tpu_custom_call.1} parent=1 // pred_fallthru
      _
    %v87 = vld [vmem:[#allocation2] sm:$0xff]
    %v88 = vld [vmem:[#allocation2 + $0x8] sm:$0xff]
    %v89 = vld [vmem:[#allocation5] sm:$0xff]
    %v90 = vld [vmem:[#allocation5 + $0x8] sm:$0xff]
    %v91 = vld [vmem:[#allocation7] sm:$0xff]
    %v92 = vld [vmem:[#allocation7 + $0x8] sm:$0xff]
    %v93 = vld [vmem:[#allocation8] sm:$0xff]
    %v94 = vld [vmem:[#allocation8 + $0x8] sm:$0xff]
    %v95 = vmax.f32 %v89, 0.0
    %v96 = vmax.f32 %v90, 0.0
    %v97 = vand.u32 2147483647, %v89
    %v98 = vand.u32 2147483647, %v90
    %v99 = vsub.f32 0.0, %v97
    %v100 = vsub.f32 0.0, %v98
    %v101 = vmul.f32 %v99, 1.442695
    %v102 = vpow.pop %v101
    %v103 = vmul.f32 %v100, 1.442695
    %v104 = vpow.pop %v103
    %v105 = vadd.f32 %v102, 1.0
    %v106 = vlog2.pop %v105
    %v107 = vmul.f32 %v106, 0.6931472
    %v108 = vmul.f32 -0.5, %v102
    %v109 = vadd.f32 %v108, 1.0
    %v110 = vmul.f32 %v109, %v102
    %v111 = vand.u32 2147483647, %v102
    %vm112 = vcmp.lt.f32.partialorder %v111, 0.0004427343
    %v113 = vsel %vm112, %v110, %v107
    %v114 = vadd.f32 %v104, 1.0
    %v115 = vlog2.pop %v114
    %v116 = vmul.f32 %v115, 0.6931472
    %v117 = vmul.f32 -0.5, %v104
    %v118 = vadd.f32 %v117, 1.0
    %v119 = vmul.f32 %v118, %v104
    %v120 = vand.u32 2147483647, %v104
    %vm121 = vcmp.lt.f32.partialorder %v120, 0.0004427343
    %v122 = vsel %vm121, %v119, %v116
    %v123 = vadd.f32 %v95, %v113
    %v124 = vadd.f32 %v96, %v122
    %v125 = vmax.f32 %v93, 0.0
    %v126 = vmax.f32 %v94, 0.0
    %v127 = vand.u32 2147483647, %v93
    %v128 = vand.u32 2147483647, %v94
    %v129 = vsub.f32 0.0, %v127
    %v130 = vsub.f32 0.0, %v128
    %v131 = vmul.f32 %v129, 1.442695
    %v132 = vpow.pop %v131
    %v133 = vmul.f32 %v130, 1.442695
    %v134 = vpow.pop %v133
    %v135 = vadd.f32 %v132, 1.0
    %v136 = vlog2.pop %v135
    %v137 = vmul.f32 %v136, 0.6931472
    %v138 = vmul.f32 -0.5, %v132
    %v139 = vadd.f32 %v138, 1.0
    %v140 = vmul.f32 %v139, %v132
    %v141 = vand.u32 2147483647, %v132
    %vm142 = vcmp.lt.f32.partialorder %v141, 0.0004427343
    %v143 = vsel %vm142, %v140, %v137
    %v144 = vadd.f32 %v134, 1.0
    %v145 = vlog2.pop %v144
    %v146 = vmul.f32 %v145, 0.6931472
    %v147 = vmul.f32 -0.5, %v134
    %v148 = vadd.f32 %v147, 1.0
    %v149 = vmul.f32 %v148, %v134
    %v150 = vand.u32 2147483647, %v134
    %vm151 = vcmp.lt.f32.partialorder %v150, 0.0004427343
    %v152 = vsel %vm151, %v149, %v146
    %v153 = vadd.f32 %v125, %v143
    %v154 = vadd.f32 %v126, %v152
    %v155 = vlog2.pop %v153
    %v156 = vmul.f32 %v155, 0.6931472
    %v157 = vlog2.pop %v154
    %v158 = vmul.f32 %v157, 0.6931472
    %v159 = vlog2.pop %v123
    %v160 = vmul.f32 %v159, 0.6931472
    %v161 = vlog2.pop %v124
    %v162 = vmul.f32 %v161, 0.6931472
    %v163 = vsub.f32 %v156, %v160
    %v164 = vsub.f32 %v158, %v162
    %v165 = vmul.f32 %v153, 2.0
    %v166 = vmul.f32 %v154, 2.0
    %v167 = vmul.f32 %v165, %v153
    %v168 = vmul.f32 %v166, %v154
    %v169 = vrcp.pop %v167
    %v170 = vrcp.pop %v168
    %v171 = vsub.f32 %v87, %v91
    %v172 = vsub.f32 %v88, %v92
    %v173 = vmul.f32 %v123, %v123
    %v174 = vmul.f32 %v124, %v124
    %v175 = vmul.f32 %v171, %v171
    %v176 = vmul.f32 %v172, %v172
    %v177 = vadd.f32 %v173, %v175
    %v178 = vadd.f32 %v174, %v176
    %v179 = vmul.f32 %v177, %v169
    %v180 = vmul.f32 %v178, %v170
    %v181 = vadd.f32 %v163, %v179
    %v182 = vadd.f32 %v164, %v180
    %v183 = vsub.f32 %v181, 0.5
    %v184 = vsub.f32 %v182, 0.5
    %v185 = vmul.f32 %v123, 17.079468
    %v186 = vmul.f32 %v124, 17.079468
    %v187 = vadd.f32 %v183, %v185
    %v188 = vadd.f32 %v184, %v186
    %v189 = vld [vmem:[#allocation10] sm:$0x1]
    %vm190 = vcmask 261120
    %v191 = vsel %vm190, %v187, 0.0
    %v192 = vsel %vm190, %v188, 0.0
    %v193 = vadd.f32 %v191, %v192
    %194 = vadd.xlane.f32.xlu0 %v193
    %v195 = vpop.xlane.xlu0 %194
    %v196 = vrot.slane %v195, 4
    %v197 = vadd.f32 %v195, %v196
    %v198 = vrot.slane %v197, 2
    %v199 = vadd.f32 %v197, %v198
    %v200 = vrot.slane %v199, 1
    %v201 = vadd.f32 %v199, %v200
    %s202 = vtos %v201
    %v203 = vstv %s202
    %v204 = vadd.f32 %v189, %v203
    %vm205 = vcmask 0
    %206 = vst.msk [vmem:[#allocation10] sm:$0x1] %vm205, %v204
    // Predicated region
    $region38: #{tpu_custom_call.1} parent=1 // pred_check
      _
    $region39: #{tpu_custom_call.1} parent=1 // pred_check_branch
      %208 = sbr.rel (0) target = $region41
    $region40: #{tpu_custom_call.1} parent=1 // pred_region
      %210 = vsyncadd [#allocation4], 0
      %s212 = sshll.u32 [#allocation10], 4
      %s213 = int_to_ptr.vmem [resolvable:$true] %s212
      %s214 = sshll.u32 %s4, 4
      %s215 = int_to_ptr.hbm [resolvable:$true] %s214
      %217 = dma.vmem_to_hbm [thread:$0]  %s213, 16, %s215, [#allocation4]
    $region41: #{tpu_custom_call.1} parent=1 // pred_fallthru
      _
    // Predicated region
    $region42: #{tpu_custom_call.1} parent=1 // pred_check
      _
    $region43: #{tpu_custom_call.1} parent=1 // pred_check_branch
      %219 = sbr.rel (0) target = $region45
    $region44: #{tpu_custom_call.1} parent=1 // pred_region
      %221 = dma.done [#allocation4], 16
    $region45: #{tpu_custom_call.1} parent=1 // pred_fallthru
      _
    %222 = vsyncpa [#allocation3], 1
    %223 = vsyncpa [#allocation6], 1
    %224 = vsyncpa [#allocation9], 1
    %225 = vsyncpa [#allocation4], 1

</llo_original>
